<compile_context>
chip_gen: v7x
topology: tpu7x:2x2x1
jax: 0.10.0
libtpu: 0.0.40
codegen_flags: <defaults>
</compile_context>

<pallas_src>
import functools

import jax
import jax.numpy as jnp
from jax.experimental import pallas as pl
from jax.experimental.pallas import tpu as pltpu

LANE = 128          # vreg lane width
SUBLANE = 8         # f32 sublane count
MAX_TILE_ROWS = 512 # 512 x 128 f32 = 256 KiB per input tile


def _round_up(x, m):
    return ((x + m - 1) // m) * m


def _d_loss_kernel(real_ref, fake_ref, out_ref, acc_ref, *,
                   inv_n_real, inv_n_fake):
    """Tiled clamped-log sum reduction; scale + combine in the epilogue."""
    i = pl.program_id(0)

    @pl.when(i == 0)
    def _init():
        acc_ref[0] = 0.0
        acc_ref[1] = 0.0

    real = real_ref[...]   # (tile_rows, 128) f32, lane-dense
    fake = fake_ref[...]

    # Raw clamped-log sums only; no per-tile divide / negate in the hot loop.
    acc_ref[0] += jnp.sum(jnp.maximum(jnp.log(real), -100.0))
    acc_ref[1] += jnp.sum(jnp.maximum(jnp.log(1.0 - fake), -100.0))

    @pl.when(i == pl.num_programs(0) - 1)
    def _finalize():
        d_real = -acc_ref[0] * inv_n_real   # 1/N is a compile-time constant
        d_fake = -acc_ref[1] * inv_n_fake
        out_ref[0] = d_real + d_fake
        out_ref[1] = d_real
        out_ref[2] = d_fake


def _prep_lane_dense(x, pad_value, rows_padded):
    """Flatten, cast to f32 once, pad with a zero-contribution value, reshape
    to a lane-dense (rows_padded, 128) slab."""
    flat = jnp.ravel(x).astype(jnp.float32)
    pad = rows_padded * LANE - flat.shape[0]
    if pad:
        flat = jnp.concatenate(
            [flat, jnp.full((pad,), pad_value, dtype=jnp.float32)])
    return flat.reshape(rows_padded, LANE)


def d_loss(D_real, D_fake):
    """Returns (d_loss, d_real_loss, d_fake_loss) as float32 scalars."""
    n_real = int(D_real.size)
    n_fake = int(D_fake.size)

    # Lane-dense row count (multiple of 8 sublanes), tiled at <= 512 rows.
    rows = -(-max(n_real, n_fake) // LANE)
    tile_rows = min(MAX_TILE_ROWS, _round_up(rows, SUBLANE))
    rows_padded = _round_up(rows, tile_rows)
    grid = (rows_padded // tile_rows,)

    # Padding values contribute exactly 0 to the clamped-log sums:
    #   real pad 1.0 -> log(1) = 0 ; fake pad 0.0 -> log(1 - 0) = 0.
    real2d = _prep_lane_dense(D_real, 1.0, rows_padded)
    fake2d = _prep_lane_dense(D_fake, 0.0, rows_padded)

    kernel = functools.partial(_d_loss_kernel,
                               inv_n_real=1.0 / n_real,
                               inv_n_fake=1.0 / n_fake)

    out = pl.pallas_call(
        kernel,
        out_shape=jax.ShapeDtypeStruct((3,), jnp.float32),
        grid_spec=pltpu.PrefetchScalarGridSpec(
            num_scalar_prefetch=0,
            grid=grid,
            in_specs=[
                pl.BlockSpec((tile_rows, LANE), lambda i: (i, 0)),
                pl.BlockSpec((tile_rows, LANE), lambda i: (i, 0)),
            ],
            out_specs=pl.BlockSpec(memory_space=pltpu.SMEM),
            scratch_shapes=[pltpu.SMEM((2,), jnp.float32)],
        ),
        compiler_params=pltpu.CompilerParams(
            # Reduction axis with a carried SMEM accumulator -> "arbitrary".
            dimension_semantics=("arbitrary",),
        ),
    )(real2d, fake2d)
    return out[0], out[1], out[2]


def _d_loss_ref(D_real, D_fake):
    log_real = jnp.maximum(jnp.log(D_real.astype(jnp.float32)), -100.0)
    log_omf = jnp.maximum(jnp.log(1.0 - D_fake.astype(jnp.float32)), -100.0)
    d_real_loss = -jnp.mean(log_real)
    d_fake_loss = -jnp.mean(log_omf)
    return d_real_loss + d_fake_loss, d_real_loss, d_fake_loss


if __name__ == "__main__":
    key = jax.random.PRNGKey(0)

    # --- small case, matching the module's typical (batch, 1) sigmoid output
    k1, k2, k3, k4 = jax.random.split(key, 4)
    D_real = jax.random.uniform(k1, (8, 1), dtype=jnp.float32,
                                minval=0.05, maxval=0.95)
    D_fake = jax.random.uniform(k2, (8, 1), dtype=jnp.float32,
                                minval=0.05, maxval=0.95)

    got = d_loss(D_real, D_fake)
    jax.block_until_ready(got)
    want = _d_loss_ref(D_real, D_fake)
    for g, w in zip(got, want):
        assert jnp.allclose(g, w, rtol=1e-5, atol=1e-6), (g, w)

    # --- larger case to exercise the padded, multi-tile streaming path
    D_real_big = jax.random.uniform(k3, (70000, 1), dtype=jnp.float32,
                                    minval=0.01, maxval=0.99)
    D_fake_big = jax.random.uniform(k4, (70000, 1), dtype=jnp.float32,
                                    minval=0.01, maxval=0.99)

    got_b = d_loss(D_real_big, D_fake_big)
    jax.block_until_ready(got_b)
    want_b = _d_loss_ref(D_real_big, D_fake_big)
    for g, w in zip(got_b, want_b):
        assert jnp.allclose(g, w, rtol=5e-4, atol=1e-5), (g, w)

    print("KERNEL_OK")
</pallas_src>

<mosaic_0001>
module attributes {stable_mosaic.version = 11 : i64} {
  func.func @_d_loss_kernel(%arg0: i32, %arg1: memref<8x128xf32, #tpu.memory_space<vmem>>, %arg2: memref<8x128xf32, #tpu.memory_space<vmem>>, %arg3: memref<3xf32, #tpu.memory_space<smem>>, %arg4: memref<2xf32, #tpu.memory_space<smem>>) attributes {dimension_semantics = [#tpu.dimension_semantics<arbitrary>], iteration_bounds = array<i64: 1>, scalar_prefetch = 0 : i64, scratch_operands = 1 : i64, tpu.core_type = #tpu.core_type<tc>, window_params = [{transform_indices = @transform_0, window_bounds = array<i64: 8, 128>}, {transform_indices = @transform_1, window_bounds = array<i64: 8, 128>}, {transform_indices = @transform_2, window_bounds = array<i64: 3>}]} {
    %c0_i32 = arith.constant 0 : i32
    %0 = arith.cmpi eq, %arg0, %c0_i32 : i32
    %1 = arith.extui %0 : i1 to i32
    %c0_i32_0 = arith.constant 0 : i32
    %2 = arith.cmpi ne, %1, %c0_i32_0 : i32
    scf.if %2 {
      %cst_13 = arith.constant 0.000000e+00 : f32
      %c0_14 = arith.constant 0 : index
      %30 = memref.load %arg4[%c0_14] : memref<2xf32, #tpu.memory_space<smem>>
      memref.store %cst_13, %arg4[%c0_14] : memref<2xf32, #tpu.memory_space<smem>>
      %cst_15 = arith.constant 0.000000e+00 : f32
      %c1_16 = arith.constant 1 : index
      %31 = memref.load %arg4[%c1_16] : memref<2xf32, #tpu.memory_space<smem>>
      memref.store %cst_15, %arg4[%c1_16] : memref<2xf32, #tpu.memory_space<smem>>
    } else {
    }
    %c0 = arith.constant 0 : index
    %c0_1 = arith.constant 0 : index
    %3 = vector.load %arg1[%c0, %c0_1] : memref<8x128xf32, #tpu.memory_space<vmem>>, vector<8x128xf32>
    %c0_2 = arith.constant 0 : index
    %c0_3 = arith.constant 0 : index
    %4 = vector.load %arg2[%c0_2, %c0_3] : memref<8x128xf32, #tpu.memory_space<vmem>>, vector<8x128xf32>
    %c0_4 = arith.constant 0 : index
    %5 = memref.load %arg4[%c0_4] : memref<2xf32, #tpu.memory_space<smem>>
    %6 = math.log %3 : vector<8x128xf32>
    %cst = arith.constant -1.000000e+02 : f32
    %7 = vector.broadcast %cst : f32 to vector<8x128xf32>
    %8 = arith.maximumf %6, %7 : vector<8x128xf32>
    %9 = vector.shape_cast %8 : vector<8x128xf32> to vector<1x8x128xf32>
    %cst_5 = arith.constant dense<0.000000e+00> : vector<1xf32>
    %10 = vector.multi_reduction <add>, %9, %cst_5 [1, 2] : vector<1x8x128xf32> to vector<1xf32>
    %11 = vector.shape_cast %10 : vector<1xf32> to vector<1x1x1xf32>
    %12 = vector.extract %11[0, 0, 0] : f32 from vector<1x1x1xf32>
    %13 = arith.addf %5, %12 : f32
    %c0_6 = arith.constant 0 : index
    %14 = memref.load %arg4[%c0_6] : memref<2xf32, #tpu.memory_space<smem>>
    memref.store %13, %arg4[%c0_6] : memref<2xf32, #tpu.memory_space<smem>>
    %c1 = arith.constant 1 : index
    %15 = memref.load %arg4[%c1] : memref<2xf32, #tpu.memory_space<smem>>
    %cst_7 = arith.constant 1.000000e+00 : f32
    %16 = vector.broadcast %cst_7 : f32 to vector<8x128xf32>
    %17 = arith.subf %16, %4 : vector<8x128xf32>
    %18 = math.log %17 : vector<8x128xf32>
    %cst_8 = arith.constant -1.000000e+02 : f32
    %19 = vector.broadcast %cst_8 : f32 to vector<8x128xf32>
    %20 = arith.maximumf %18, %19 : vector<8x128xf32>
    %21 = vector.shape_cast %20 : vector<8x128xf32> to vector<1x8x128xf32>
    %cst_9 = arith.constant dense<0.000000e+00> : vector<1xf32>
    %22 = vector.multi_reduction <add>, %21, %cst_9 [1, 2] : vector<1x8x128xf32> to vector<1xf32>
    %23 = vector.shape_cast %22 : vector<1xf32> to vector<1x1x1xf32>
    %24 = vector.extract %23[0, 0, 0] : f32 from vector<1x1x1xf32>
    %25 = arith.addf %15, %24 : f32
    %c1_10 = arith.constant 1 : index
    %26 = memref.load %arg4[%c1_10] : memref<2xf32, #tpu.memory_space<smem>>
    memref.store %25, %arg4[%c1_10] : memref<2xf32, #tpu.memory_space<smem>>
    %c0_i32_11 = arith.constant 0 : i32
    %27 = arith.cmpi eq, %arg0, %c0_i32_11 : i32
    %28 = arith.extui %27 : i1 to i32
    %c0_i32_12 = arith.constant 0 : i32
    %29 = arith.cmpi ne, %28, %c0_i32_12 : i32
    scf.if %29 {
      %c0_13 = arith.constant 0 : index
      %30 = memref.load %arg4[%c0_13] : memref<2xf32, #tpu.memory_space<smem>>
      %cst_14 = arith.constant 0.000000e+00 : f32
      %31 = arith.subf %cst_14, %30 : f32
      %cst_15 = arith.constant 1.250000e-01 : f32
      %32 = arith.mulf %31, %cst_15 : f32
      %c1_16 = arith.constant 1 : index
      %33 = memref.load %arg4[%c1_16] : memref<2xf32, #tpu.memory_space<smem>>
      %cst_17 = arith.constant 0.000000e+00 : f32
      %34 = arith.subf %cst_17, %33 : f32
      %cst_18 = arith.constant 1.250000e-01 : f32
      %35 = arith.mulf %34, %cst_18 : f32
      %36 = arith.addf %32, %35 : f32
      %c0_19 = arith.constant 0 : index
      %37 = memref.load %arg3[%c0_19] : memref<3xf32, #tpu.memory_space<smem>>
      memref.store %36, %arg3[%c0_19] : memref<3xf32, #tpu.memory_space<smem>>
      %c1_20 = arith.constant 1 : index
      %38 = memref.load %arg3[%c1_20] : memref<3xf32, #tpu.memory_space<smem>>
      memref.store %32, %arg3[%c1_20] : memref<3xf32, #tpu.memory_space<smem>>
      %c2 = arith.constant 2 : index
      %39 = memref.load %arg3[%c2] : memref<3xf32, #tpu.memory_space<smem>>
      memref.store %35, %arg3[%c2] : memref<3xf32, #tpu.memory_space<smem>>
    } else {
    }
    return
  }
  func.func @transform_0(%arg0: i32) -> (i32, i32) {
    %c0_i32 = arith.constant 0 : i32
    %c0_i32_0 = arith.constant 0 : i32
    return %arg0, %c0_i32 : i32, i32
  }
  func.func @transform_1(%arg0: i32) -> (i32, i32) {
    %c0_i32 = arith.constant 0 : i32
    %c0_i32_0 = arith.constant 0 : i32
    return %arg0, %c0_i32 : i32, i32
  }
  func.func @transform_2(%arg0: i32) -> i32 {
    %c0_i32 = arith.constant 0 : i32
    %c0_i32_0 = arith.constant 0 : i32
    return %c0_i32 : i32
  }
}

</mosaic_0001>

<llo_original>
// kernel: tpu_custom_call.1
$region0: #{tpu_custom_call.1}
  #allocation0 [shape = 'u32[]', space=smem, size = 0x4, offset = 0x4, fixed_abs, tag = 'smem constant byte address 0x4 - core index']
  #allocation1 [shape = 'u32[144,128]{1,0:T(1,128)}', space=vmem, size = 0x12000, scoped, tag = 'internal scratch']
  #allocation2 [shape = 'f32[2]{0:T(128)}', space=smem, size = 0x200, scoped, tag = 'scratch operand']
  %s0 = inlined_call_operand.hbm [shape: f32[8,128], index: 0, kind: input, shape index: {}]
  %s1 = inlined_call_operand.hbm [shape: f32[8,128], index: 1, kind: input, shape index: {}]
  %s2 = inlined_call_operand.hbm [shape: f32[3], index: 2, kind: output, shape index: {}]
  %s3 = sld [smem:[#allocation0]]
  $region34: #{tpu_custom_call.1} parent=0
    _
  %s5 = ssub.s32 1, %s3
  %s6 = scalar_select 0, %s5, %s3
  $region1: #{tpu_custom_call.1} parent=0
    #allocation3 [shape = 'u8[4096]{0}', space=vmem, size = 0x1000, scoped, tag = 'input window, operand 0, single buffered']
    #allocation4 [shape = 's32[1]{0}', space=sflag, size = 0x4, scoped, tag = 'scoped memory for tpu_custom_call.1']
    #allocation5 [shape = 's32[1]{0}', space=sflag, size = 0x4, scoped, tag = 'scoped memory for tpu_custom_call.1']
    #allocation6 [shape = 'u8[4096]{0}', space=vmem, size = 0x1000, scoped, tag = 'input window, operand 1, single buffered']
    #allocation7 [shape = 's32[1]{0}', space=sflag, size = 0x4, scoped, tag = 'scoped memory for tpu_custom_call.1']
    #allocation8 [shape = 'u8[512]{0}', space=smem, size = 0x200, scoped, tag = 'output window, operand 0, single buffered']
    %7 = vsyncpa [#allocation4], 0
    %8 = vsyncpa [#allocation7], 0
    %9 = vsyncpa [#allocation5], 0
    // Predicated region
    $region2: #{tpu_custom_call.1} parent=1 // pred_check
      _
    $region3: #{tpu_custom_call.1} parent=1 // pred_check_branch
      %11 = sbr.rel (0) target = $region5
    $region4: #{tpu_custom_call.1} parent=1 // pred_region
      %s13 = ssub.s32 128, 128
      %14 = vsyncadd [#allocation4], %s13
      %s16 = sshll.u32 [#allocation3], 4
      %s17 = int_to_ptr.vmem [resolvable:$true] %s16
      %19 = dma.hbm_to_vmem [thread:$0]  %s0, 128, %s17, [#allocation4]
    $region5: #{tpu_custom_call.1} parent=1 // pred_fallthru
      _
    // Predicated region
    $region6: #{tpu_custom_call.1} parent=1 // pred_check
      _
    $region7: #{tpu_custom_call.1} parent=1 // pred_check_branch
      %21 = sbr.rel (0) target = $region9
    $region8: #{tpu_custom_call.1} parent=1 // pred_region
      %s23 = ssub.s32 128, 128
      %24 = vsyncadd [#allocation7], %s23
      %s26 = sshll.u32 [#allocation6], 4
      %s27 = int_to_ptr.vmem [resolvable:$true] %s26
      %29 = dma.hbm_to_vmem [thread:$0]  %s1, 128, %s27, [#allocation7]
    $region9: #{tpu_custom_call.1} parent=1 // pred_fallthru
      _
    // Predicated region
    $region10: #{tpu_custom_call.1} parent=1 // pred_check
      _
    $region11: #{tpu_custom_call.1} parent=1 // pred_check_branch
      %31 = sbr.rel (0) target = $region13
    $region12: #{tpu_custom_call.1} parent=1 // pred_region
      %32 = dma.done [#allocation4], 128
    $region13: #{tpu_custom_call.1} parent=1 // pred_fallthru
      _
    // Predicated region
    $region14: #{tpu_custom_call.1} parent=1 // pred_check
      _
    $region15: #{tpu_custom_call.1} parent=1 // pred_check_branch
      %34 = sbr.rel (0) target = $region17
    $region16: #{tpu_custom_call.1} parent=1 // pred_region
      %35 = dma.done [#allocation7], 128
    $region17: #{tpu_custom_call.1} parent=1 // pred_fallthru
      _
    %p36 = scmp.eq.s32.totalorder 0, 0
    // Predicated region
    $region18: #{tpu_custom_call.1} parent=1 // pred_check
      %p37 = pneg %p36
    $region19: #{tpu_custom_call.1} parent=1 // pred_check_branch
      %39 = sbr.rel (%p37) target = $region21
    $region20: #{tpu_custom_call.1} parent=1 // pred_region
      %s40 = scalar_lea.smem [#allocation2], 0
      %41 = sst [smem:[%s40]] 0.0
      %s42 = scalar_lea.smem [#allocation2], 1
      %43 = sst [smem:[%s42]] 0.0
    $region21: #{tpu_custom_call.1} parent=1 // pred_fallthru
      _
    %v44 = vld [vmem:[#allocation3] sm:$0xff]
    %v45 = vld [vmem:[#allocation6] sm:$0xff]
    %s46 = sld [smem:[#allocation2]]
    %v47 = vlog2.pop %v44
    %v48 = vmul.f32 %v47, 0.6931472
    %v49 = vmax.f32 %v48, -100.0
    %50 = vadd.xlane.f32.xlu0 %v49
    %v51 = vpop.xlane.xlu0 %50
    %v52 = vrot.slane %v51, 4
    %v53 = vadd.f32 %v51, %v52
    %v54 = vrot.slane %v53, 2
    %v55 = vadd.f32 %v53, %v54
    %v56 = vrot.slane %v55, 1
    %v57 = vadd.f32 %v55, %v56
    %s58 = vtos %v57
    %s59 = sadd.f32 %s46, %s58
    %s60 = scalar_lea.smem [#allocation2], 0
    %61 = sst [smem:[%s60]] %s59
    %s62 = sld [smem:[#allocation2 + $0x1]]
    %v63 = vsub.f32 1.0, %v45
    %v64 = vlog2.pop %v63
    %v65 = vmul.f32 %v64, 0.6931472
    %v66 = vmax.f32 %v65, -100.0
    %67 = vadd.xlane.f32.xlu0 %v66
    %v68 = vpop.xlane.xlu0 %67
    %v69 = vrot.slane %v68, 4
    %v70 = vadd.f32 %v68, %v69
    %v71 = vrot.slane %v70, 2
    %v72 = vadd.f32 %v70, %v71
    %v73 = vrot.slane %v72, 1
    %v74 = vadd.f32 %v72, %v73
    %s75 = vtos %v74
    %s76 = sadd.f32 %s62, %s75
    %s77 = scalar_lea.smem [#allocation2], 1
    %78 = sst [smem:[%s77]] %s76
    // Predicated region
    $region22: #{tpu_custom_call.1} parent=1 // pred_check
      %p79 = pneg %p36
    $region23: #{tpu_custom_call.1} parent=1 // pred_check_branch
      %81 = sbr.rel (%p79) target = $region25
    $region24: #{tpu_custom_call.1} parent=1 // pred_region
      %s82 = sld [smem:[#allocation2]]
      %s83 = ssub.f32 0.0, %s82
      %s84 = smul.f32 %s83, 0.125
      %s85 = sld [smem:[#allocation2 + $0x1]]
      %s86 = ssub.f32 0.0, %s85
      %s87 = smul.f32 %s86, 0.125
      %s88 = sadd.f32 %s84, %s87
      %s89 = scalar_lea.smem [#allocation8], 0
      %90 = sst [smem:[%s89]] %s88
      %s91 = scalar_lea.smem [#allocation8], 1
      %92 = sst [smem:[%s91]] %s84
      %s93 = scalar_lea.smem [#allocation8], 2
      %94 = sst [smem:[%s93]] %s87
    $region25: #{tpu_custom_call.1} parent=1 // pred_fallthru
      _
    // Predicated region
    $region26: #{tpu_custom_call.1} parent=1 // pred_check
      _
    $region27: #{tpu_custom_call.1} parent=1 // pred_check_branch
      %96 = sbr.rel (0) target = $region29
    $region28: #{tpu_custom_call.1} parent=1 // pred_region
      %s98 = ssub.s32 16, 16
      %99 = vsyncadd [#allocation5], %s98
      %102 = dma.smem_to_hbm [#allocation8], 16, %s2, [#allocation5]
    $region29: #{tpu_custom_call.1} parent=1 // pred_fallthru
      _
    // Predicated region
    $region30: #{tpu_custom_call.1} parent=1 // pred_check
      _
    $region31: #{tpu_custom_call.1} parent=1 // pred_check_branch
      %104 = sbr.rel (0) target = $region33
    $region32: #{tpu_custom_call.1} parent=1 // pred_region
      %105 = dma.done [#allocation5], 16
    $region33: #{tpu_custom_call.1} parent=1 // pred_fallthru
      _
    %106 = sfence
    %107 = vsyncpa [#allocation4], 1
    %108 = vsyncpa [#allocation7], 1
    %109 = vsyncpa [#allocation5], 1

</llo_original>
